<compile_context>
chip_gen: v6e
topology: v6e:2x2x1
jax: 0.10.0
libtpu: 0.0.40
codegen_flags: <defaults>
</compile_context>

<pallas_src>
import jax
import jax.numpy as jnp
from jax import lax
from jax.experimental import pallas as pl
from jax.experimental.pallas import tpu as pltpu


def _packed_matvec_kernel(w_ref, xp_ref, o_ref):
    # w_ref:  (P, L)    replicated 1/h weights (constant block across steps)
    # xp_ref: (TMp, L)  lane-packed X tile (pipelined, double-buffered)
    # o_ref:  (P, TMp)  lane-dense output block: o[j, p] = y[P*p + j]
    o_ref[...] = lax.dot_general(
        w_ref[...],
        xp_ref[...],
        dimension_numbers=(((1,), (1,)), ((), ())),
        preferred_element_type=jnp.float32,
    ).astype(o_ref.dtype)


def _round_up(x, m):
    return ((x + m - 1) // m) * m


def simple_model_forward(X, h, *, block_rows=None, vmem_limit_bytes=None):
    """Pallas equivalent of simpleModel.forward.

    X: (N, d) float32, h: (d,) float32  ->  (N,) float32 = X @ (1 / h)
    """
    N, d = X.shape
    dtype = X.dtype
    itemsize = jnp.dtype(dtype).itemsize

    # Lane-packing factor: P original rows per 128-lane packed row (P=1 fallback).
    P = 128 // d if (d <= 128 and 128 % d == 0) else 1
    L = P * d

    # Reciprocal hoisted out of the kernel; baked into the packed weight W.
    h_inv = (1.0 / h.astype(dtype))
    W = jnp.kron(jnp.eye(P, dtype=dtype), h_inv[None, :])  # (P, L), W[j, d*j+k]=1/h[k]

    # Tile sizing: ~8 MiB of real X data per step; alignment so the packed input
    # block (TMp, L) and the lane-dense output block (P, TMp) satisfy the
    # (8, 128) layout rules (TMp multiple of 128  <=>  TM multiple of 128*P).
    align = 128 * P
    if block_rows is None:
        target_bytes = 8 * 1024 * 1024
        block_rows = max(align, target_bytes // (d * itemsize))
    TM = _round_up(block_rows, align)
    TM = min(TM, _round_up(N, align))
    if N >= 4 * align:
        # Keep >= ~4 grid steps (2 per TensorCore on v7x megacore) when possible.
        TM = min(TM, _round_up(pl.cdiv(N, 4), align))

    N_pad = _round_up(N, TM)
    if N_pad != N:
        X = jnp.pad(X, ((0, N_pad - N), (0, 0)))

    Np = N_pad // P           # total packed rows
    TMp = TM // P             # packed rows per tile
    Xp = X.reshape(Np, L)     # free reshape: identical HBM bytes, contiguous rows
    grid = (Np // TMp,)

    if vmem_limit_bytes is None:
        # Generation-aware scoped-VMEM cap (~3/4 of physical: v7x 48 MiB/TC,
        # v5e/v6e 96 MiB). Packed double-buffered footprint is ~2*TMp*L*4 B.
        try:
            cap = pltpu.get_tpu_info().vmem_capacity_bytes
        except Exception:
            cap = 64 * 1024 * 1024
        vmem_limit_bytes = max(32 * 1024 * 1024, (3 * cap) // 4)

    cost = pl.CostEstimate(
        flops=2 * N_pad * d,
        transcendentals=0,
        bytes_accessed=itemsize * (N_pad * d + N_pad + P * L),
    )

    out = pl.pallas_call(
        _packed_matvec_kernel,
        out_shape=jax.ShapeDtypeStruct((P, Np), dtype),
        grid_spec=pltpu.PrefetchScalarGridSpec(
            num_scalar_prefetch=0,
            grid=grid,
            in_specs=[
                pl.BlockSpec((P, L), lambda i: (0, 0)),     # W: same block each step
                pl.BlockSpec((TMp, L), lambda i: (i, 0)),   # pipelined packed X tiles
            ],
            out_specs=pl.BlockSpec((P, TMp), lambda i: (0, i)),  # lane-dense output
        ),
        compiler_params=pltpu.CompilerParams(
            dimension_semantics=("parallel",),   # independent row tiles (v7x: 2 TCs)
            vmem_limit_bytes=vmem_limit_bytes,
        ),
        cost_estimate=cost,
    )(W, Xp)

    # out[j, p] = y[P*p + j]  ->  y = out.T.reshape(-1)[:N]
    return out.T.reshape(-1)[:N]


if __name__ == "__main__":
    # Module config: d = 32; default init_h = 1 -> h = ones(d).
    d = 32
    N = 1000  # deliberately not a multiple of the tile size (exercises padding)

    key = jax.random.PRNGKey(0)
    kx, kh = jax.random.split(key)
    X = jax.random.normal(kx, (N, d), dtype=jnp.float32)

    h_init = jnp.ones((d,), dtype=jnp.float32)  # nn.Parameter(torch.ones(d) * 1)
    h_rand = jax.random.uniform(kh, (d,), dtype=jnp.float32, minval=0.5, maxval=2.0)

    for h in (h_init, h_rand):
        # Small tiles so the grid has multiple pipelined steps at this toy N.
        y = jax.block_until_ready(simple_model_forward(X, h, block_rows=256))
        y_ref = jnp.sum(X * (1.0 / h)[None, :], axis=-1)
        assert y.shape == (N,)
        assert jnp.allclose(y, y_ref, atol=2e-5, rtol=1e-5), float(
            jnp.max(jnp.abs(y - y_ref)))

    # Also run the default (large-tile) path once.
    y = jax.block_until_ready(simple_model_forward(X, h_rand))
    y_ref = jnp.sum(X * (1.0 / h_rand)[None, :], axis=-1)
    assert jnp.allclose(y, y_ref, atol=2e-5, rtol=1e-5)

    print("KERNEL_OK")
</pallas_src>

<mosaic_0001>
module attributes {stable_mosaic.version = 11 : i64} {
  func.func @_packed_matvec_kernel(%arg0: i32, %arg1: memref<4x128xf32, #tpu.memory_space<vmem>>, %arg2: memref<128x128xf32, #tpu.memory_space<vmem>>, %arg3: memref<4x128xf32, #tpu.memory_space<vmem>>) attributes {dimension_semantics = [#tpu.dimension_semantics<parallel>], iteration_bounds = array<i64: 2>, scalar_prefetch = 0 : i64, scratch_operands = 0 : i64, tpu.core_type = #tpu.core_type<tc>, window_params = [{pipeline_mode = #tpu.pipeline_mode<synchronous>, transform_indices = @transform_0, window_bounds = array<i64: 4, 128>}, {transform_indices = @transform_1, window_bounds = array<i64: 128, 128>}, {transform_indices = @transform_2, window_bounds = array<i64: 4, 128>}]} {
    %c0 = arith.constant 0 : index
    %c0_0 = arith.constant 0 : index
    %0 = vector.load %arg1[%c0, %c0_0] : memref<4x128xf32, #tpu.memory_space<vmem>>, vector<4x128xf32>
    %c0_1 = arith.constant 0 : index
    %c0_2 = arith.constant 0 : index
    %1 = vector.load %arg2[%c0_1, %c0_2] : memref<128x128xf32, #tpu.memory_space<vmem>>, vector<128x128xf32>
    %cst = arith.constant dense<0.000000e+00> : vector<4x128xf32>
    %2 = tpu.matmul %0, %1, %cst {dimension_numbers = #tpu.dot_dimension_numbers<[1], [1], [0], [0], [0, 0, 1, 0], [], []>} : vector<4x128xf32>, vector<128x128xf32>, vector<4x128xf32> -> vector<4x128xf32>
    %c0_3 = arith.constant 0 : index
    %c0_4 = arith.constant 0 : index
    %3 = vector.load %arg3[%c0_3, %c0_4] : memref<4x128xf32, #tpu.memory_space<vmem>>, vector<4x128xf32>
    tpu.vector_store %arg3[%c0_3, %c0_4], %2 {strides = array<i32>} : memref<4x128xf32, #tpu.memory_space<vmem>>, vector<4x128xf32>,
    return
  }
  func.func @transform_0(%arg0: i32) -> (i32, i32) {
    %c0_i32 = arith.constant 0 : i32
    %c0_i32_0 = arith.constant 0 : i32
    %c0_i32_1 = arith.constant 0 : i32
    return %c0_i32, %c0_i32_0 : i32, i32
  }
  func.func @transform_1(%arg0: i32) -> (i32, i32) {
    %c0_i32 = arith.constant 0 : i32
    %c0_i32_0 = arith.constant 0 : i32
    return %arg0, %c0_i32 : i32, i32
  }
  func.func @transform_2(%arg0: i32) -> (i32, i32) {
    %c0_i32 = arith.constant 0 : i32
    %c0_i32_0 = arith.constant 0 : i32
    return %c0_i32, %arg0 : i32, i32
  }
}

</mosaic_0001>

<llo_original>
// kernel: tpu_custom_call.1
$region0: #{tpu_custom_call.1}
  #allocation0 [shape = 'u32[]', space=smem, size = 0x4, offset = 0x4, fixed_abs, tag = 'smem constant byte address 0x4 - core index']
  #allocation1 [shape = 'u32[144,128]{1,0:T(1,128)}', space=vmem, size = 0x12000, scoped, tag = 'internal scratch']
  %s0 = inlined_call_operand.hbm [shape: f32[4,128], index: 0, kind: input, shape index: {}]
  %s1 = inlined_call_operand.hbm [shape: f32[256,128], index: 1, kind: input, shape index: {}]
  %s2 = inlined_call_operand.hbm [shape: f32[4,256], index: 2, kind: output, shape index: {}]
  %s3 = sld [smem:[#allocation0]]
  $region49: #{tpu_custom_call.1} parent=0
    _
  %s5 = ssub.s32 1, %s3
  %s6 = scalar_select 0, %s5, %s3
  $region1: #{tpu_custom_call.1} parent=0
    #allocation2 [shape = 'u8[2048]{0}', space=vmem, size = 0x800, scoped, tag = 'input window, operand 0, single buffered']
    #allocation3 [shape = 's32[2]{0}', space=sflag, size = 0x8, scoped, tag = 'scoped memory for tpu_custom_call.1']
    #allocation4 [shape = 's32[2]{0}', space=sflag, size = 0x8, scoped, tag = 'scoped memory for tpu_custom_call.1']
    #allocation5 [shape = 'u8[131072]{0}', space=vmem, size = 0x20000, scoped, tag = 'input window, operand 1']
    #allocation6 [shape = 's32[2]{0}', space=sflag, size = 0x8, scoped, tag = 'scoped memory for tpu_custom_call.1']
    #allocation7 [shape = 'u8[4096]{0}', space=vmem, size = 0x1000, scoped, tag = 'output window, operand 0']
    %7 = vsyncpa [#allocation3], 0
    %8 = vsyncpa [#allocation6], 0
    %s9 = scalar_lea.sflag [#allocation6], 1
    %10 = vsyncpa %s9, 0
    %11 = vsyncpa [#allocation4], 0
    %s12 = scalar_lea.sflag [#allocation4], 1
    %13 = vsyncpa %s12, 0
    loop: start=0, step=1, limit=4
    $region2: #{tpu_custom_call.1} parent=1 // loop_pre_header
      _
    $region3: #{tpu_custom_call.1} parent=1 // loop_header
      %s15 = sphi 0, %s19
      %p16 = scmp.ge.s32.totalorder %s15, 4
      %s23 = sphi 0, %s23
      %s25 = sphi 0, %s23
      %s26 = sphi 0, %s25
      %s40 = sphi 0, %s26
      %s46 = sphi 0, %s48
      %s49 = sphi 0, %s46
      %s50 = sphi 0, %s49
      %s66 = sphi 0, %s50
      %s72 = sphi 0, %s74
      %s75 = sphi 0, %s72
      %s76 = sphi 0, %s75
      %s92 = sphi 0, %s76
    $region4: #{tpu_custom_call.1} parent=1 // loop_header_branch
      %18 = sbr.rel (%p16) target = $region8
    $region5: #{tpu_custom_call.1} parent=1 // loop_body
      %s20 = ssub.s32 %s15, 1
      %s21 = ssub.s32 %s15, 2
      %s22 = sadd.s32 %s15, 1
      %s24 = sadd.s32 %s23, 1
      %p27 = scmp.eq.s32.totalorder %s15, 1
      %p28 = scmp.ne.s32.totalorder %s23, %s25
      %p29 = scmp.eq.s32.totalorder %s15, 0
      %p30 = por %p28, %p29
      %p31 = scmp.ne.s32.totalorder %s23, %s25
      %p32 = scmp.eq.s32.totalorder %s20, 1
      %p33 = por %p31, %p32
      %p34 = scmp.ne.s32.totalorder %s25, %s26
      %p35 = scmp.eq.s32.totalorder %s20, 0
      %p36 = por %p34, %p35
      %p37 = scmp.ne.s32.totalorder %s25, %s26
      %p38 = scmp.eq.s32.totalorder %s21, 1
      %p39 = por %p37, %p38
      %p41 = scmp.ne.s32.totalorder %s26, %s40
      %p42 = scmp.eq.s32.totalorder %s21, 0
      %p43 = por %p41, %p42
      %s44 = ssub.s32 %s15, %s22
      %p45 = scmp.eq.s32.totalorder %s44, 0
      %s47 = sadd.s32 %s46, 1
      %s48 = scalar_select %p45, %s46, %s47
      %p51 = pneg %p45
      %p52 = scmp.eq.s32.totalorder %s15, 1
      %p53 = por %p51, %p52
      %p54 = scmp.ne.s32.totalorder %s46, %s49
      %p55 = scmp.eq.s32.totalorder %s15, 0
      %p56 = por %p54, %p55
      %p57 = scmp.ne.s32.totalorder %s46, %s49
      %p58 = scmp.eq.s32.totalorder %s20, 1
      %p59 = por %p57, %p58
      %p60 = scmp.ne.s32.totalorder %s49, %s50
      %p61 = scmp.eq.s32.totalorder %s20, 0
      %p62 = por %p60, %p61
      %p63 = scmp.ne.s32.totalorder %s49, %s50
      %p64 = scmp.eq.s32.totalorder %s21, 1
      %p65 = por %p63, %p64
      %p67 = scmp.ne.s32.totalorder %s50, %s66
      %p68 = scmp.eq.s32.totalorder %s21, 0
      %p69 = por %p67, %p68
      %s70 = ssub.s32 %s15, %s22
      %p71 = scmp.eq.s32.totalorder %s70, 0
      %s73 = sadd.s32 %s72, 1
      %s74 = scalar_select %p71, %s72, %s73
      %p77 = pneg %p71
      %p78 = scmp.eq.s32.totalorder %s15, 1
      %p79 = por %p77, %p78
      %p80 = scmp.ne.s32.totalorder %s72, %s75
      %p81 = scmp.eq.s32.totalorder %s15, 0
      %p82 = por %p80, %p81
      %p83 = scmp.ne.s32.totalorder %s72, %s75
      %p84 = scmp.eq.s32.totalorder %s20, 1
      %p85 = por %p83, %p84
      %p86 = scmp.ne.s32.totalorder %s75, %s76
      %p87 = scmp.eq.s32.totalorder %s20, 0
      %p88 = por %p86, %p87
      %p89 = scmp.ne.s32.totalorder %s75, %s76
      %p90 = scmp.eq.s32.totalorder %s21, 1
      %p91 = por %p89, %p90
      %p93 = scmp.ne.s32.totalorder %s76, %s92
      %p94 = scmp.eq.s32.totalorder %s21, 0
      %p95 = por %p93, %p94
      %p96 = scmp.le.s32.totalorder 1, %s15
      %p97 = scmp.lt.s32.totalorder %s15, 3
      %p98 = pnand %p96, %p97
      %p99 = pneg %p98
      // Predicated region
      $region9: #{tpu_custom_call.1} parent=5 // pred_check
        _
      $region10: #{tpu_custom_call.1} parent=5 // pred_check_branch
        %101 = sbr.rel (%p98) target = $region12
      $region11: #{tpu_custom_call.1} parent=5 // pred_region
        %s102 = ssub.s32 %s15, 1
        // Predicated region
        $region13: #{tpu_custom_call.1} parent=11 // pred_check
          %p103 = pneg %p36
        $region14: #{tpu_custom_call.1} parent=11 // pred_check_branch
          %105 = sbr.rel (%p103) target = $region16
        $region15: #{tpu_custom_call.1} parent=11 // pred_region
          %s107 = ssub.s32 64, 64
          %108 = vsyncadd [#allocation3], %s107
          %s110 = sshll.u32 [#allocation2], 4
          %s111 = int_to_ptr.vmem [resolvable:$true] %s110
          %113 = dma.hbm_to_vmem [thread:$0]  %s0, 64, %s111, [#allocation3]
        $region16: #{tpu_custom_call.1} parent=11 // pred_fallthru
          _
      $region12: #{tpu_custom_call.1} parent=5 // pred_fallthru
        _
      %p114 = scmp.lt.s32.totalorder %s15, 2
      // Predicated region
      $region17: #{tpu_custom_call.1} parent=5 // pred_check
        %p115 = pneg %p114
      $region18: #{tpu_custom_call.1} parent=5 // pred_check_branch
        %117 = sbr.rel (%p115) target = $region20
      $region19: #{tpu_custom_call.1} parent=5 // pred_region
        // Predicated region
        $region21: #{tpu_custom_call.1} parent=19 // pred_check
          %p118 = pneg %p56
        $region22: #{tpu_custom_call.1} parent=19 // pred_check_branch
          %120 = sbr.rel (%p118) target = $region24
        $region23: #{tpu_custom_call.1} parent=19 // pred_region
          %s121 = sand.u32 %s46, 1
          %s122 = scalar_lea.sflag [#allocation6], %s121
          %s123 = sand.u32 %s46, 1
          %s124 = smul.addr %s123, 128
          %s125 = scalar_lea.vmem [#allocation5], %s124
          %s126 = smul.u32 16, %s15
          %s128 = ssub.s32 2048, 2048
          %129 = vsyncadd %s122, %s128
          %s130 = smul.addr %s126, 128
          %s131 = scalar_lea.hbm %s1, %s130
          %s132 = sshll.u32 %s125, 4
          %s133 = int_to_ptr.vmem [resolvable:$true] %s132
          %138 = dma.hbm_to_vmem [thread:$0]  %s131, 2048, %s133, %s122, 128, 128, 8
        $region24: #{tpu_custom_call.1} parent=19 // pred_fallthru
          _
      $region20: #{tpu_custom_call.1} parent=5 // pred_fallthru
        _
      %p139 = scmp.le.s32.totalorder 1, %s15
      %p140 = scmp.lt.s32.totalorder %s15, 3
      %p141 = pnand %p139, %p140
      %p142 = pneg %p141
      // Predicated region
      $region25: #{tpu_custom_call.1} parent=5 // pred_check
        _
      $region26: #{tpu_custom_call.1} parent=5 // pred_check_branch
        %144 = sbr.rel (%p141) target = $region28
      $region27: #{tpu_custom_call.1} parent=5 // pred_region
        %s145 = ssub.s32 %s15, 1
        // Predicated region
        $region29: #{tpu_custom_call.1} parent=27 // pred_check
          %p146 = pneg %p36
        $region30: #{tpu_custom_call.1} parent=27 // pred_check_branch
          %148 = sbr.rel (%p146) target = $region32
        $region31: #{tpu_custom_call.1} parent=27 // pred_region
          %149 = dma.done [#allocation3], 64
        $region32: #{tpu_custom_call.1} parent=27 // pred_fallthru
          _
        %s150 = sand.u32 %s49, 1
        %s151 = scalar_lea.sflag [#allocation6], %s150
        %s152 = sand.u32 %s49, 1
        %s153 = smul.addr %s152, 128
        %s154 = scalar_lea.vmem [#allocation5], %s153
        // Predicated region
        $region33: #{tpu_custom_call.1} parent=27 // pred_check
          %p155 = pneg %p62
        $region34: #{tpu_custom_call.1} parent=27 // pred_check_branch
          %157 = sbr.rel (%p155) target = $region36
        $region35: #{tpu_custom_call.1} parent=27 // pred_region
          %158 = dma.done %s151, 2048
        $region36: #{tpu_custom_call.1} parent=27 // pred_fallthru
          _
        %p159 = pneg %p36
        %p160 = pneg %p33
        %s161 = sand.u32 %s49, 1
        %s162 = scalar_lea.sflag [#allocation6], %s161
        %s163 = sand.u32 %s49, 1
        %s164 = smul.addr %s163, 128
        %s165 = scalar_lea.vmem [#allocation5], %s164
        %p166 = pneg %p62
        %p167 = pneg %p59
        %p168 = pneg %p88
        %p169 = pneg %p85
        %s170 = sand.u32 %s75, 1
        %s171 = scalar_lea.sflag [#allocation4], %s170
        %s172 = sand.u32 %s75, 1
        %s173 = smul.addr %s172, 4
        %s174 = scalar_lea.vmem [#allocation7], %s173
        %s175 = smul.u32 16, %s20
        %v176 = vld [vmem:[#allocation2] sm:$0xf]
        %v177 = vld [vmem:[%s154] sm:$0xff]
        %v178 = vld [vmem:[%s154 + $0x8] sm:$0xff]
        %v179 = vld [vmem:[%s154 + $0x10] sm:$0xff]
        %v180 = vld [vmem:[%s154 + $0x18] sm:$0xff]
        %v181 = vld [vmem:[%s154 + $0x20] sm:$0xff]
        %v182 = vld [vmem:[%s154 + $0x28] sm:$0xff]
        %v183 = vld [vmem:[%s154 + $0x30] sm:$0xff]
        %v184 = vld [vmem:[%s154 + $0x38] sm:$0xff]
        %v185 = vld [vmem:[%s154 + $0x40] sm:$0xff]
        %v186 = vld [vmem:[%s154 + $0x48] sm:$0xff]
        %v187 = vld [vmem:[%s154 + $0x50] sm:$0xff]
        %v188 = vld [vmem:[%s154 + $0x58] sm:$0xff]
        %v189 = vld [vmem:[%s154 + $0x60] sm:$0xff]
        %v190 = vld [vmem:[%s154 + $0x68] sm:$0xff]
        %v191 = vld [vmem:[%s154 + $0x70] sm:$0xff]
        %v192 = vld [vmem:[%s154 + $0x78] sm:$0xff]
        %193 = vmatprep.subr.mxu0 0.0
        %194 = vmatpush1.xpose.msra.mxu0 %v192
        %195 = vmatprep.subr.mxu0 0.0
        %196 = vmatpush1.xpose.msra.mxu0 %v191
        %197 = vmatprep.subr.mxu0 0.0
        %198 = vmatpush1.xpose.msra.mxu0 %v190
        %199 = vmatprep.subr.mxu0 0.0
        %200 = vmatpush1.xpose.msra.mxu0 %v189
        %201 = vmatprep.subr.mxu0 0.0
        %202 = vmatpush1.xpose.msra.mxu0 %v188
        %203 = vmatprep.subr.mxu0 0.0
        %204 = vmatpush1.xpose.msra.mxu0 %v187
        %205 = vmatprep.subr.mxu0 0.0
        %206 = vmatpush1.xpose.msra.mxu0 %v186
        %207 = vmatprep.subr.mxu0 0.0
        %208 = vmatpush1.xpose.msra.mxu0 %v185
        %209 = vmatprep.subr.mxu0 0.0
        %210 = vmatpush1.xpose.msra.mxu0 %v184
        %211 = vmatprep.subr.mxu0 0.0
        %212 = vmatpush1.xpose.msra.mxu0 %v183
        %213 = vmatprep.subr.mxu0 0.0
        %214 = vmatpush1.xpose.msra.mxu0 %v182
        %215 = vmatprep.subr.mxu0 0.0
        %216 = vmatpush1.xpose.msra.mxu0 %v181
        %217 = vmatprep.subr.mxu0 0.0
        %218 = vmatpush1.xpose.msra.mxu0 %v180
        %219 = vmatprep.subr.mxu0 0.0
        %220 = vmatpush1.xpose.msra.mxu0 %v179
        %221 = vmatprep.subr.mxu0 0.0
        %222 = vmatpush1.xpose.msra.mxu0 %v178
        %223 = vmatprep.subr.mxu0 0.0
        %224 = vmatpush1.xpose.msra.mxu0 %v177
        %225 = vmatprep.subr.mxu0 0.0
        %226 = vmatpush2.xpose.msra.mxu0 0.0
        %227 = vmatprep.subr.mxu0 0.0
        %228 = vmatpush2.xpose.msra.mxu0 0.0
        %229 = vmatprep.subr.mxu0 0.0
        %230 = vmatpush2.xpose.msra.mxu0 0.0
        %231 = vmatprep.subr.mxu0 0.0
        %232 = vmatpush2.xpose.msra.mxu0 0.0
        %233 = vmatprep.subr.mxu0 0.0
        %234 = vmatpush2.xpose.msra.mxu0 0.0
        %235 = vmatprep.subr.mxu0 0.0
        %236 = vmatpush2.xpose.msra.mxu0 0.0
        %237 = vmatprep.subr.mxu0 0.0
        %238 = vmatpush2.xpose.msra.mxu0 0.0
        %239 = vmatprep.subr.mxu0 0.0
        %240 = vmatpush2.xpose.msra.mxu0 0.0
        %241 = vmatprep.subr.mxu0 0.0
        %242 = vmatpush2.xpose.msra.mxu0 0.0
        %243 = vmatprep.subr.mxu0 0.0
        %244 = vmatpush2.xpose.msra.mxu0 0.0
        %245 = vmatprep.subr.mxu0 0.0
        %246 = vmatpush2.xpose.msra.mxu0 0.0
        %247 = vmatprep.subr.mxu0 0.0
        %248 = vmatpush2.xpose.msra.mxu0 0.0
        %249 = vmatprep.subr.mxu0 0.0
        %250 = vmatpush2.xpose.msra.mxu0 0.0
        %251 = vmatprep.subr.mxu0 0.0
        %252 = vmatpush2.xpose.msra.mxu0 0.0
        %253 = vmatprep.subr.mxu0 0.0
        %254 = vmatpush2.xpose.msra.mxu0 0.0
        %255 = vmatprep.subr.mxu0 0.0
        %256 = vmatpush2.xpose.msra.mxu0 0.0
        %257 = vmatprep.mubr.f32.mxu0 0.0
        %258 = vmatmul.mubr.f32.gmra.mxu0 %v176
        %v259 = vpop.f32.mrf.mxu0
        %v260 = vadd.f32 0.0, %v259
        %v261 = vpop.f32.mrf.mxu0
        %262 = vdwg.mxu0
        %263 = vst [vmem:[%s174] sm:$0xf] %v260
        %s264 = sand.u32 %s75, 1
        %s265 = scalar_lea.sflag [#allocation4], %s264
        %s266 = sand.u32 %s75, 1
        %s267 = smul.addr %s266, 4
        %s268 = scalar_lea.vmem [#allocation7], %s267
        // Predicated region
        $region37: #{tpu_custom_call.1} parent=27 // pred_check
          %p269 = pneg %p85
        $region38: #{tpu_custom_call.1} parent=27 // pred_check_branch
          %271 = sbr.rel (%p269) target = $region40
        $region39: #{tpu_custom_call.1} parent=27 // pred_region
          %s273 = ssub.s32 64, 64
          %274 = vsyncadd %s265, %s273
          %s275 = smul.addr %s20, 64
          %s276 = scalar_lea.hbm %s2, %s275
          %s278 = sshll.u32 %s268, 4
          %s279 = int_to_ptr.vmem [resolvable:$true] %s278
          %281 = dma.vmem_to_hbm [thread:$0]  %s279, 64, %s276, %s265
        $region40: #{tpu_custom_call.1} parent=27 // pred_fallthru
          _
      $region28: #{tpu_custom_call.1} parent=5 // pred_fallthru
        _
      %p282 = scmp.le.s32.totalorder 2, %s15
      // Predicated region
      $region41: #{tpu_custom_call.1} parent=5 // pred_check
        %p283 = pneg %p282
      $region42: #{tpu_custom_call.1} parent=5 // pred_check_branch
        %285 = sbr.rel (%p283) target = $region44
      $region43: #{tpu_custom_call.1} parent=5 // pred_region
        %s286 = ssub.s32 %s15, 2
        // Predicated region
        $region45: #{tpu_custom_call.1} parent=43 // pred_check
          %p287 = pneg %p91
        $region46: #{tpu_custom_call.1} parent=43 // pred_check_branch
          %289 = sbr.rel (%p287) target = $region48
        $region47: #{tpu_custom_call.1} parent=43 // pred_region
          %s290 = sand.u32 %s76, 1
          %s291 = scalar_lea.sflag [#allocation4], %s290
          %s292 = sand.u32 %s76, 1
          %s293 = smul.addr %s292, 4
          %s294 = scalar_lea.vmem [#allocation7], %s293
          %295 = dma.done %s291, 64
        $region48: #{tpu_custom_call.1} parent=43 // pred_fallthru
          _
      $region44: #{tpu_custom_call.1} parent=5 // pred_fallthru
        _
    $region6: #{tpu_custom_call.1} parent=1 // loop_footer
      %s19 = sadd.s32 1, %s15
    $region7: #{tpu_custom_call.1} parent=1 // loop_footer_branch
      %14 = sbr.rel target = $region3
    $region8: #{tpu_custom_call.1} parent=1 // loop_exit
      _
    %296 = vsyncpa [#allocation3], 1
    %s297 = scalar_lea.sflag [#allocation3], 1
    %298 = vsyncpa %s297, 1
    %299 = vsyncpa [#allocation6], 1
    %s300 = scalar_lea.sflag [#allocation6], 1
    %301 = vsyncpa %s300, 1
    %302 = vsyncpa [#allocation4], 1
    %s303 = scalar_lea.sflag [#allocation4], 1
    %304 = vsyncpa %s303, 1

</llo_original>
